<compile_context>
chip_gen: v7x
topology: tpu7x:2x2x1
jax: 0.10.0
libtpu: 0.0.40
codegen_flags: <defaults>
</compile_context>

<pallas_src>
import functools
import math

import jax
import jax.numpy as jnp
from jax.experimental import pallas as pl
from jax.experimental.pallas import tpu as pltpu


# ---------------------------------------------------------------------------
# Hot kernel: tiled attention-logit assembly.
#   out[b, i, j] = leaky_relu(e_src[b, i] + e_dst[b, j])
# ---------------------------------------------------------------------------
def _attn_tile_kernel(esrc_ref, edst_ref, out_ref, *, lrelu_slope, use_max):
    # esrc_ref: [1, TI, 1]   column term (broadcast along lanes / j)
    # edst_ref: [1, 1, TJ]   row term    (broadcast along sublanes / i)
    # out_ref:  [1, TI, TJ]
    e = esrc_ref[...] + edst_ref[...]          # -> [1, TI, TJ]
    if use_max:
        # Valid only for 0 < slope < 1: one VALU op cheaper than compare+select.
        out = jnp.maximum(e, lrelu_slope * e)
    else:
        out = jnp.where(e > 0, e, lrelu_slope * e)
    out_ref[...] = out.astype(out_ref.dtype)


def _round_up(x, m):
    return ((x + m - 1) // m) * m


def _choose_tiles(B, N, itemsize):
    """Pick (TI, TJ) for the (B, N, N) output: lane-dense, ~2 MiB, >=4 steps."""
    # Lane (j) tile: full extent when it fits, else 1024-wide aligned chunks.
    TJ = N if N <= 1024 else 1024
    # Sublane (i) tile: aim for ~2 MiB output tiles; multiple of 8 unless full.
    target_bytes = 2 * 1024 * 1024
    ti = max(8, (target_bytes // (TJ * itemsize)) // 8 * 8)
    TI = N if ti >= N else ti

    def steps(ti_):
        return B * pl.cdiv(N, ti_) * pl.cdiv(N, TJ)

    # Keep >= 4 parallel grid steps when possible (v7x: 2 TCs shard "parallel"
    # axes; a 1-2 step grid idles a core).
    while steps(TI) < 4 and TI > 8:
        new_ti = max(8, _round_up(TI // 2, 8))
        if new_ti >= TI:
            break
        TI = new_ti
    return TI, TJ


def _leaky_relu_xla(e, slope):
    if 0.0 < slope < 1.0:
        return jnp.maximum(e, slope * e)
    return jnp.where(e > 0, e, slope * e)


def gat_layer_forward(h, W, a, lrelu_slope, out_dtype=jnp.float32,
                      force_pallas=False):
    """h: [B, N, Fin] f32; W: [Fin, F] f32; a: [2F, 1] f32. Returns [B, N, N]."""
    B, N, Fin = h.shape
    F = W.shape[1]
    itemsize = jnp.dtype(out_dtype).itemsize
    hi_prec = jax.lax.Precision.HIGHEST

    # ---- Stage 1 (tiny, XLA): fold W into the attention vector --------------
    #   wa = W @ [a1 | a2]          [Fin, 2]
    #   epair[b, n, :] = h[b, n] @ wa  -> (e_src, e_dst) per node
    a_cat = jnp.concatenate([a[:F, :], a[F:, :]], axis=1)            # [F, 2]
    wa = jnp.dot(W, a_cat, precision=hi_prec)                        # [Fin, 2]
    epair = jnp.einsum("bnf,fk->bnk", h, wa, precision=hi_prec)      # [B, N, 2]
    e_src = epair[:, :, 0:1]                                         # [B, N, 1]
    e_dst = epair[:, :, 1][:, None, :]                               # [B, 1, N]

    # ---- Tiny-problem fallback: XLA fuses the broadcast-add + LeakyReLU -----
    tiny = (N < 128) or (B * N * N * itemsize < 512 * 1024)
    if tiny and not force_pallas:
        return _leaky_relu_xla(e_src + e_dst, lrelu_slope).astype(out_dtype)

    # ---- Stage 2 (hot, Pallas): tiled broadcast-add + LeakyReLU --------------
    TI, TJ = _choose_tiles(B, N, itemsize)
    gi, gj = pl.cdiv(N, TI), pl.cdiv(N, TJ)

    # Zero-pad the O(B*N) inputs so every input block read is in-bounds; the
    # (B, N, N) output keeps its true shape — edge blocks overhang and Pallas
    # masks the out-of-bounds stores.
    NI, NJ = gi * TI, gj * TJ
    if NI != N:
        e_src = jnp.pad(e_src, ((0, 0), (0, NI - N), (0, 0)))
    if NJ != N:
        e_dst = jnp.pad(e_dst, ((0, 0), (0, 0), (0, NJ - N)))

    kernel = functools.partial(
        _attn_tile_kernel,
        lrelu_slope=float(lrelu_slope),
        use_max=(0.0 < float(lrelu_slope) < 1.0),
    )

    return pl.pallas_call(
        kernel,
        out_shape=jax.ShapeDtypeStruct((B, N, N), out_dtype),
        grid_spec=pltpu.PrefetchScalarGridSpec(
            num_scalar_prefetch=0,
            # j innermost: the e_src column block (index constant in j) stays
            # resident across the whole j sweep.
            grid=(B, gi, gj),
            in_specs=[
                pl.BlockSpec((1, TI, 1), lambda b, i, j: (b, i, 0)),
                pl.BlockSpec((1, 1, TJ), lambda b, i, j: (b, 0, j)),
            ],
            out_specs=pl.BlockSpec((1, TI, TJ), lambda b, i, j: (b, i, j)),
        ),
        compiler_params=pltpu.CompilerParams(
            dimension_semantics=("parallel", "parallel", "parallel"),
            vmem_limit_bytes=32 * 1024 * 1024,
        ),
    )(e_src, e_dst)


# ---------------------------------------------------------------------------
# Reference + test harness
# ---------------------------------------------------------------------------
def _xavier_uniform(key, shape, gain):
    fan_in, fan_out = shape[0], shape[1]
    bound = gain * math.sqrt(6.0 / (fan_in + fan_out))
    return jax.random.uniform(key, shape, jnp.float32, minval=-bound, maxval=bound)


def _reference(h, W, a, lrelu_slope):
    # Pure-JAX reference reproducing the PyTorch module verbatim
    # (builds the [B, N, N, 2F] pair tensor explicitly).
    B, N, _ = h.shape
    F = W.shape[1]
    hi = jax.lax.Precision.HIGHEST
    Wh = jnp.einsum("bnf,fo->bno", h, W, precision=hi)
    rep_chunks = jnp.repeat(Wh, N, axis=1)                 # repeat_interleave
    rep_alt = jnp.tile(Wh, (1, N, 1))                      # repeat
    a_input = jnp.concatenate([rep_chunks, rep_alt], -1).reshape(B, N, N, 2 * F)
    e = jnp.einsum("bijf,fo->bijo", a_input, a, precision=hi)[..., 0]
    return jnp.where(e > 0, e, lrelu_slope * e)


if __name__ == "__main__":
    # Small shapes consistent with the module's forward: h is [B, N, in_features]
    B, N = 2, 8
    in_features = 16
    augment_feature = 32
    lrelu_slope = 0.2

    key = jax.random.PRNGKey(0)
    k_h, k_w, k_a, k_h2, k_h3 = jax.random.split(key, 5)

    h = jax.random.normal(k_h, (B, N, in_features), jnp.float32)
    W = _xavier_uniform(k_w, (in_features, augment_feature), gain=1.414)
    a = _xavier_uniform(k_a, (2 * augment_feature, 1), gain=1.414)

    # 1) Tiny-N path: pure-XLA fallback (launch overhead not worth a kernel).
    out = jax.block_until_ready(gat_layer_forward(h, W, a, lrelu_slope))
    ref = _reference(h, W, a, lrelu_slope)
    assert out.shape == (B, N, N)
    assert jnp.allclose(out, ref, atol=1e-4, rtol=1e-4), "mismatch (tiny-N fallback)"

    # 2) Moderate N, tile-divisible: Pallas hot path with a multi-step grid.
    N2 = 384
    h2 = jax.random.normal(k_h2, (B, N2, in_features), jnp.float32)
    out2 = jax.block_until_ready(gat_layer_forward(h2, W, a, lrelu_slope))
    ref2 = _reference(h2, W, a, lrelu_slope)
    assert out2.shape == (B, N2, N2)
    assert jnp.allclose(out2, ref2, atol=1e-4, rtol=1e-4), "mismatch (tiled, N=384)"

    # 3) Non-divisible N: exercises padded inputs + masked edge output stores.
    N3 = 200
    h3 = jax.random.normal(k_h3, (B, N3, in_features), jnp.float32)
    out3 = jax.block_until_ready(
        gat_layer_forward(h3, W, a, lrelu_slope, force_pallas=True))
    ref3 = _reference(h3, W, a, lrelu_slope)
    assert out3.shape == (B, N3, N3)
    assert jnp.allclose(out3, ref3, atol=1e-4, rtol=1e-4), "mismatch (ragged, N=200)"

    print("KERNEL_OK")
</pallas_src>

<mosaic_0001>
module attributes {stable_mosaic.version = 11 : i64} {
  func.func @_attn_tile_kernel(%arg0: i32, %arg1: i32, %arg2: i32, %arg3: memref<1x192x1xf32, #tpu.memory_space<vmem>>, %arg4: memref<1x1x384xf32, #tpu.memory_space<vmem>>, %arg5: memref<1x192x384xf32, #tpu.memory_space<vmem>>) attributes {dimension_semantics = [#tpu.dimension_semantics<parallel>, #tpu.dimension_semantics<parallel>, #tpu.dimension_semantics<parallel>], iteration_bounds = array<i64: 2, 2, 1>, scalar_prefetch = 0 : i64, scratch_operands = 0 : i64, tpu.core_type = #tpu.core_type<tc>, window_params = [{transform_indices = @transform_0, window_bounds = array<i64: 1, 192, 1>}, {transform_indices = @transform_1, window_bounds = array<i64: 1, 1, 384>}, {transform_indices = @transform_2, window_bounds = array<i64: 1, 192, 384>}]} {
    %c0 = arith.constant 0 : index
    %c0_0 = arith.constant 0 : index
    %c0_1 = arith.constant 0 : index
    %0 = vector.load %arg3[%c0, %c0_0, %c0_1] : memref<1x192x1xf32, #tpu.memory_space<vmem>>, vector<1x192x1xf32>
    %c0_2 = arith.constant 0 : index
    %c0_3 = arith.constant 0 : index
    %c0_4 = arith.constant 0 : index
    %1 = vector.load %arg4[%c0_2, %c0_3, %c0_4] : memref<1x1x384xf32, #tpu.memory_space<vmem>>, vector<1x1x384xf32>
    %2 = vector.broadcast %0 : vector<1x192x1xf32> to vector<1x192x384xf32>
    %3 = vector.broadcast %1 : vector<1x1x384xf32> to vector<1x192x384xf32>
    %4 = arith.addf %2, %3 : vector<1x192x384xf32>
    %cst = arith.constant 2.000000e-01 : f32
    %5 = vector.broadcast %cst : f32 to vector<1x192x384xf32>
    %6 = arith.mulf %5, %4 : vector<1x192x384xf32>
    %7 = arith.maximumf %4, %6 : vector<1x192x384xf32>
    %c0_5 = arith.constant 0 : index
    %c0_6 = arith.constant 0 : index
    %c0_7 = arith.constant 0 : index
    %8 = vector.load %arg5[%c0_5, %c0_6, %c0_7] : memref<1x192x384xf32, #tpu.memory_space<vmem>>, vector<1x192x384xf32>
    tpu.vector_store %arg5[%c0_5, %c0_6, %c0_7], %7 {strides = array<i32>} : memref<1x192x384xf32, #tpu.memory_space<vmem>>, vector<1x192x384xf32>,
    return
  }
  func.func @transform_0(%arg0: i32, %arg1: i32, %arg2: i32) -> (i32, i32, i32) {
    %c0_i32 = arith.constant 0 : i32
    %c0_i32_0 = arith.constant 0 : i32
    return %arg0, %arg1, %c0_i32 : i32, i32, i32
  }
  func.func @transform_1(%arg0: i32, %arg1: i32, %arg2: i32) -> (i32, i32, i32) {
    %c0_i32 = arith.constant 0 : i32
    %c0_i32_0 = arith.constant 0 : i32
    return %arg0, %c0_i32, %arg2 : i32, i32, i32
  }
  func.func @transform_2(%arg0: i32, %arg1: i32, %arg2: i32) -> (i32, i32, i32) {
    %c0_i32 = arith.constant 0 : i32
    return %arg0, %arg1, %arg2 : i32, i32, i32
  }
}

</mosaic_0001>

<llo_original>
// kernel: tpu_custom_call.1
$region0: #{tpu_custom_call.1}
  #allocation0 [shape = 'u32[]', space=smem, size = 0x4, offset = 0x4, fixed_abs, tag = 'smem constant byte address 0x4 - core index']
  #allocation1 [shape = 'u32[144,128]{1,0:T(1,128)}', space=vmem, size = 0x12000, scoped, tag = 'internal scratch']
  %s0 = inlined_call_operand.vmem [shape: f32[2,384,1], index: 0, kind: input, shape index: {}]
  %s1 = inlined_call_operand.hbm [shape: f32[2,1,384], index: 1, kind: input, shape index: {}]
  %s2 = inlined_call_operand.hbm [shape: f32[2,384,384], index: 2, kind: output, shape index: {}]
  %s3 = sld [smem:[#allocation0]]
  $region45: #{tpu_custom_call.1} parent=0
    _
  %s5 = ssub.s32 1, %s3
  %s6 = scalar_select 0, %s5, %s3
  $region1: #{tpu_custom_call.1} parent=0
    #allocation2 [shape = 'u8[3072]{0}', space=vmem, size = 0xc00, scoped, tag = 'input window, operand 1']
    #allocation3 [shape = 's32[2]{0}', space=sflag, size = 0x8, scoped, tag = 'scoped memory for tpu_custom_call.1']
    #allocation4 [shape = 's32[2]{0}', space=sflag, size = 0x8, scoped, tag = 'scoped memory for tpu_custom_call.1']
    #allocation5 [shape = 'u8[589824]{0}', space=vmem, size = 0x90000, scoped, tag = 'output window, operand 0']
    %7 = vsyncpa [#allocation3], 0
    %s8 = scalar_lea.sflag [#allocation3], 1
    %9 = vsyncpa %s8, 0
    %10 = vsyncpa [#allocation4], 0
    %s11 = scalar_lea.sflag [#allocation4], 1
    %12 = vsyncpa %s11, 0
    loop: start=0, step=1, limit=6
    $region2: #{tpu_custom_call.1} parent=1 // loop_pre_header
      _
    $region3: #{tpu_custom_call.1} parent=1 // loop_header
      %s14 = sphi 0, %s18
      %p15 = scmp.ge.s32.totalorder %s14, 6
      %s21 = sphi 0, %s40
      %s22 = sphi 0, %s36
      %s23 = sphi 0, %s32
      %s24 = sphi 0, %s21
      %s25 = sphi 0, %s22
      %s26 = sphi 0, %s23
      %s27 = sphi 0, %s24
      %s28 = sphi 0, %s25
      %s29 = sphi 0, %s26
      %s45 = sphi 0, %s47
      %s48 = sphi 0, %s45
      %s49 = sphi 0, %s48
      %s65 = sphi 0, %s49
      %s73 = sphi 0, %s75
      %s76 = sphi 0, %s73
      %s77 = sphi 0, %s76
      %s93 = sphi 0, %s77
      %s103 = sphi 0, %s105
      %s106 = sphi 0, %s103
      %s107 = sphi 0, %s106
      %s123 = sphi 0, %s107
    $region4: #{tpu_custom_call.1} parent=1 // loop_header_branch
      %17 = sbr.rel (%p15) target = $region8
    $region5: #{tpu_custom_call.1} parent=1 // loop_body
      %s19 = ssub.s32 %s14, 1
      %s20 = ssub.s32 %s14, 2
      %s30 = sadd.s32 1, %s23
      %p31 = scmp.ge.s32.totalorder %s30, 1
      %s32 = scalar_select %p31, 0, %s30
      %s33 = sadd.s32 1, %s22
      %s34 = scalar_select %p31, %s33, %s22
      %p35 = scmp.ge.s32.totalorder %s34, 2
      %s36 = scalar_select %p35, 0, %s34
      %s37 = sadd.s32 1, %s21
      %s38 = scalar_select %p35, %s37, %s21
      %p39 = scmp.ge.s32.totalorder %s38, 2
      %s40 = scalar_select %p39, 0, %s38
      %s41 = ssub.s32 %s21, %s40
      %s42 = ssub.s32 %s22, %s36
      %s43 = sor.u32 %s41, %s42
      %p44 = scmp.eq.s32.totalorder %s43, 0
      %s46 = sadd.s32 %s45, 1
      %s47 = scalar_select %p44, %s45, %s46
      %p50 = pneg %p44
      %p51 = scmp.eq.s32.totalorder %s14, 3
      %p52 = por %p50, %p51
      %p53 = scmp.ne.s32.totalorder %s45, %s48
      %p54 = scmp.eq.s32.totalorder %s14, 0
      %p55 = por %p53, %p54
      %p56 = scmp.ne.s32.totalorder %s45, %s48
      %p57 = scmp.eq.s32.totalorder %s19, 3
      %p58 = por %p56, %p57
      %p59 = scmp.ne.s32.totalorder %s48, %s49
      %p60 = scmp.eq.s32.totalorder %s19, 0
      %p61 = por %p59, %p60
      %p62 = scmp.ne.s32.totalorder %s48, %s49
      %p63 = scmp.eq.s32.totalorder %s20, 3
      %p64 = por %p62, %p63
      %p66 = scmp.ne.s32.totalorder %s49, %s65
      %p67 = scmp.eq.s32.totalorder %s20, 0
      %p68 = por %p66, %p67
      %s69 = ssub.s32 %s21, %s40
      %s70 = ssub.s32 %s23, %s32
      %s71 = sor.u32 %s69, %s70
      %p72 = scmp.eq.s32.totalorder %s71, 0
      %s74 = sadd.s32 %s73, 1
      %s75 = scalar_select %p72, %s73, %s74
      %p78 = pneg %p72
      %p79 = scmp.eq.s32.totalorder %s14, 3
      %p80 = por %p78, %p79
      %p81 = scmp.ne.s32.totalorder %s73, %s76
      %p82 = scmp.eq.s32.totalorder %s14, 0
      %p83 = por %p81, %p82
      %p84 = scmp.ne.s32.totalorder %s73, %s76
      %p85 = scmp.eq.s32.totalorder %s19, 3
      %p86 = por %p84, %p85
      %p87 = scmp.ne.s32.totalorder %s76, %s77
      %p88 = scmp.eq.s32.totalorder %s19, 0
      %p89 = por %p87, %p88
      %p90 = scmp.ne.s32.totalorder %s76, %s77
      %p91 = scmp.eq.s32.totalorder %s20, 3
      %p92 = por %p90, %p91
      %p94 = scmp.ne.s32.totalorder %s77, %s93
      %p95 = scmp.eq.s32.totalorder %s20, 0
      %p96 = por %p94, %p95
      %s97 = ssub.s32 %s21, %s40
      %s98 = ssub.s32 %s22, %s36
      %s99 = sor.u32 %s97, %s98
      %s100 = ssub.s32 %s23, %s32
      %s101 = sor.u32 %s99, %s100
      %p102 = scmp.eq.s32.totalorder %s101, 0
      %s104 = sadd.s32 %s103, 1
      %s105 = scalar_select %p102, %s103, %s104
      %p108 = pneg %p102
      %p109 = scmp.eq.s32.totalorder %s14, 3
      %p110 = por %p108, %p109
      %p111 = scmp.ne.s32.totalorder %s103, %s106
      %p112 = scmp.eq.s32.totalorder %s14, 0
      %p113 = por %p111, %p112
      %p114 = scmp.ne.s32.totalorder %s103, %s106
      %p115 = scmp.eq.s32.totalorder %s19, 3
      %p116 = por %p114, %p115
      %p117 = scmp.ne.s32.totalorder %s106, %s107
      %p118 = scmp.eq.s32.totalorder %s19, 0
      %p119 = por %p117, %p118
      %p120 = scmp.ne.s32.totalorder %s106, %s107
      %p121 = scmp.eq.s32.totalorder %s20, 3
      %p122 = por %p120, %p121
      %p124 = scmp.ne.s32.totalorder %s107, %s123
      %p125 = scmp.eq.s32.totalorder %s20, 0
      %p126 = por %p124, %p125
      %p127 = scmp.le.s32.totalorder 1, %s14
      %p128 = scmp.lt.s32.totalorder %s14, 5
      %p129 = pnand %p127, %p128
      %p130 = pneg %p129
      // Predicated region
      $region9: #{tpu_custom_call.1} parent=5 // pred_check
        _
      $region10: #{tpu_custom_call.1} parent=5 // pred_check_branch
        %132 = sbr.rel (%p129) target = $region12
      $region11: #{tpu_custom_call.1} parent=5 // pred_region
        %s133 = ssub.s32 %s14, 1
      $region12: #{tpu_custom_call.1} parent=5 // pred_fallthru
        _
      %p134 = scmp.lt.s32.totalorder %s14, 4
      // Predicated region
      $region13: #{tpu_custom_call.1} parent=5 // pred_check
        %p135 = pneg %p134
      $region14: #{tpu_custom_call.1} parent=5 // pred_check_branch
        %137 = sbr.rel (%p135) target = $region16
      $region15: #{tpu_custom_call.1} parent=5 // pred_region
        // Predicated region
        $region17: #{tpu_custom_call.1} parent=15 // pred_check
          %p138 = pneg %p55
        $region18: #{tpu_custom_call.1} parent=15 // pred_check_branch
          %140 = sbr.rel (%p138) target = $region20
        $region19: #{tpu_custom_call.1} parent=15 // pred_region
          %s141 = smul.u32 24, %s22
          %p142 = scmp.lt.s32.totalorder %s21, 1
          %s143 = scalar_select %p142, %s21, 1
          %p144 = scmp.lt.s32.totalorder %s141, 47
          %s145 = scalar_select %p144, %s141, 47
          %s146 = smul.addr %s143, 48
          %s147 = sadd.s32 %s145, %s146
          %s148 = smul.addr %s147, 8
          %s149 = scalar_lea.vmem %s0, %s148
          %s150 = smul.u32 24, %s22
        $region20: #{tpu_custom_call.1} parent=15 // pred_fallthru
          _
        // Predicated region
        $region21: #{tpu_custom_call.1} parent=15 // pred_check
          %p151 = pneg %p83
        $region22: #{tpu_custom_call.1} parent=15 // pred_check_branch
          %153 = sbr.rel (%p151) target = $region24
        $region23: #{tpu_custom_call.1} parent=15 // pred_region
          %s154 = sand.u32 %s73, 1
          %s155 = scalar_lea.sflag [#allocation3], %s154
          %s156 = sand.u32 %s73, 1
          %s157 = smul.addr %s156, 3
          %s158 = scalar_lea.vmem [#allocation2], %s157
          %s159 = smul.u32 3, %s23
          %s161 = ssub.s32 48, 48
          %162 = vsyncadd %s155, %s161
          %s163 = smul.addr %s21, 3
          %s164 = sadd.s32 %s159, %s163
          %s165 = smul.addr %s164, 16
          %s166 = scalar_lea.hbm %s1, %s165
          %s168 = sshll.u32 %s158, 4
          %s169 = int_to_ptr.vmem [resolvable:$true] %s168
          %171 = dma.hbm_to_vmem [thread:$0]  %s166, 48, %s169, %s155
        $region24: #{tpu_custom_call.1} parent=15 // pred_fallthru
          _
      $region16: #{tpu_custom_call.1} parent=5 // pred_fallthru
        _
      %p172 = scmp.le.s32.totalorder 1, %s14
      %p173 = scmp.lt.s32.totalorder %s14, 5
      %p174 = pnand %p172, %p173
      %p175 = pneg %p174
      // Predicated region
      $region25: #{tpu_custom_call.1} parent=5 // pred_check
        _
      $region26: #{tpu_custom_call.1} parent=5 // pred_check_branch
        %177 = sbr.rel (%p174) target = $region28
      $region27: #{tpu_custom_call.1} parent=5 // pred_region
        %s178 = ssub.s32 %s14, 1
        %s179 = sand.u32 %s76, 1
        %s180 = scalar_lea.sflag [#allocation3], %s179
        %s181 = sand.u32 %s76, 1
        %s182 = smul.addr %s181, 3
        %s183 = scalar_lea.vmem [#allocation2], %s182
        // Predicated region
        $region29: #{tpu_custom_call.1} parent=27 // pred_check
          %p184 = pneg %p89
        $region30: #{tpu_custom_call.1} parent=27 // pred_check_branch
          %186 = sbr.rel (%p184) target = $region32
        $region31: #{tpu_custom_call.1} parent=27 // pred_region
          %187 = dma.done %s180, 48
        $region32: #{tpu_custom_call.1} parent=27 // pred_fallthru
          _
        %s188 = smul.u32 24, %s25
        %p189 = scmp.lt.s32.totalorder %s24, 1
        %s190 = scalar_select %p189, %s24, 1
        %p191 = scmp.lt.s32.totalorder %s188, 47
        %s192 = scalar_select %p191, %s188, 47
        %s193 = smul.addr %s190, 48
        %s194 = sadd.s32 %s192, %s193
        %s195 = smul.addr %s194, 8
        %s196 = scalar_lea.vmem %s0, %s195
        %p197 = pneg %p61
        %p198 = pneg %p58
        %s199 = sand.u32 %s76, 1
        %s200 = scalar_lea.sflag [#allocation3], %s199
        %s201 = sand.u32 %s76, 1
        %s202 = smul.addr %s201, 3
        %s203 = scalar_lea.vmem [#allocation2], %s202
        %p204 = pneg %p89
        %p205 = pneg %p86
        %p206 = pneg %p119
        %p207 = pneg %p116
        %s208 = sand.u32 %s106, 1
        %s209 = scalar_lea.sflag [#allocation4], %s208
        %s210 = sand.u32 %s106, 1
        %s211 = smul.addr %s210, 576
        %s212 = scalar_lea.vmem [#allocation5], %s211
        %s213 = smul.u32 24, %s25
        %p214 = scmp.lt.s32.totalorder %s24, 1
        %s215 = scalar_select %p214, %s24, 1
        %p216 = scmp.lt.s32.totalorder %s213, 47
        %s217 = scalar_select %p216, %s213, 47
        %s218 = smul.addr %s215, 48
        %s219 = sadd.s32 %s217, %s218
        %s220 = smul.addr %s219, 8
        %s221 = scalar_lea.vmem %s0, %s220
        %s222 = smul.u32 24, %s25
        %s223 = smul.u32 3, %s26
        %s224 = smul.u32 24, %s25
        %s225 = smul.u32 3, %s26
        %v226 = vld [vmem:[%s221] sm:$0xff]
        %v227 = vld [vmem:[%s221 + $0x8] sm:$0xff]
        %v228 = vld [vmem:[%s221 + $0x10] sm:$0xff]
        %v229 = vld [vmem:[%s221 + $0x18] sm:$0xff]
        %v230 = vld [vmem:[%s221 + $0x20] sm:$0xff]
        %v231 = vld [vmem:[%s221 + $0x28] sm:$0xff]
        %v232 = vld [vmem:[%s221 + $0x30] sm:$0xff]
        %v233 = vld [vmem:[%s221 + $0x38] sm:$0xff]
        %v234 = vld [vmem:[%s221 + $0x40] sm:$0xff]
        %v235 = vld [vmem:[%s221 + $0x48] sm:$0xff]
        %v236 = vld [vmem:[%s221 + $0x50] sm:$0xff]
        %v237 = vld [vmem:[%s221 + $0x58] sm:$0xff]
        %v238 = vld [vmem:[%s221 + $0x60] sm:$0xff]
        %v239 = vld [vmem:[%s221 + $0x68] sm:$0xff]
        %v240 = vld [vmem:[%s221 + $0x70] sm:$0xff]
        %v241 = vld [vmem:[%s221 + $0x78] sm:$0xff]
        %v242 = vld [vmem:[%s221 + $0x80] sm:$0xff]
        %v243 = vld [vmem:[%s221 + $0x88] sm:$0xff]
        %v244 = vld [vmem:[%s221 + $0x90] sm:$0xff]
        %v245 = vld [vmem:[%s221 + $0x98] sm:$0xff]
        %v246 = vld [vmem:[%s221 + $0xa0] sm:$0xff]
        %v247 = vld [vmem:[%s221 + $0xa8] sm:$0xff]
        %v248 = vld [vmem:[%s221 + $0xb0] sm:$0xff]
        %v249 = vld [vmem:[%s221 + $0xb8] sm:$0xff]
        %v250 = vld [vmem:[%s183] sm:$0x7]
        %252 = vset.pattern.permute.xlu0 0
        %253 = vperm.xlu0 %252, %v226
        %v254 = vpop.permute.xlu0 %253
        %257 = vset.pattern.permute.xlu0 0
        %258 = vperm.xlu0 %257, %v227
        %v259 = vpop.permute.xlu0 %258
        %262 = vset.pattern.permute.xlu0 0
        %263 = vperm.xlu0 %262, %v228
        %v264 = vpop.permute.xlu0 %263
        %267 = vset.pattern.permute.xlu0 0
        %268 = vperm.xlu0 %267, %v229
        %v269 = vpop.permute.xlu0 %268
        %272 = vset.pattern.permute.xlu0 0
        %273 = vperm.xlu0 %272, %v230
        %v274 = vpop.permute.xlu0 %273
        %277 = vset.pattern.permute.xlu0 0
        %278 = vperm.xlu0 %277, %v231
        %v279 = vpop.permute.xlu0 %278
        %282 = vset.pattern.permute.xlu0 0
        %283 = vperm.xlu0 %282, %v232
        %v284 = vpop.permute.xlu0 %283
        %287 = vset.pattern.permute.xlu0 0
        %288 = vperm.xlu0 %287, %v233
        %v289 = vpop.permute.xlu0 %288
        %292 = vset.pattern.permute.xlu0 0
        %293 = vperm.xlu0 %292, %v234
        %v294 = vpop.permute.xlu0 %293
        %297 = vset.pattern.permute.xlu0 0
        %298 = vperm.xlu0 %297, %v235
        %v299 = vpop.permute.xlu0 %298
        %302 = vset.pattern.permute.xlu0 0
        %303 = vperm.xlu0 %302, %v236
        %v304 = vpop.permute.xlu0 %303
        %307 = vset.pattern.permute.xlu0 0
        %308 = vperm.xlu0 %307, %v237
        %v309 = vpop.permute.xlu0 %308
        %312 = vset.pattern.permute.xlu0 0
        %313 = vperm.xlu0 %312, %v238
        %v314 = vpop.permute.xlu0 %313
        %317 = vset.pattern.permute.xlu0 0
        %318 = vperm.xlu0 %317, %v239
        %v319 = vpop.permute.xlu0 %318
        %322 = vset.pattern.permute.xlu0 0
        %323 = vperm.xlu0 %322, %v240
        %v324 = vpop.permute.xlu0 %323
        %327 = vset.pattern.permute.xlu0 0
        %328 = vperm.xlu0 %327, %v241
        %v329 = vpop.permute.xlu0 %328
        %332 = vset.pattern.permute.xlu0 0
        %333 = vperm.xlu0 %332, %v242
        %v334 = vpop.permute.xlu0 %333
        %337 = vset.pattern.permute.xlu0 0
        %338 = vperm.xlu0 %337, %v243
        %v339 = vpop.permute.xlu0 %338
        %342 = vset.pattern.permute.xlu0 0
        %343 = vperm.xlu0 %342, %v244
        %v344 = vpop.permute.xlu0 %343
        %347 = vset.pattern.permute.xlu0 0
        %348 = vperm.xlu0 %347, %v245
        %v349 = vpop.permute.xlu0 %348
        %352 = vset.pattern.permute.xlu0 0
        %353 = vperm.xlu0 %352, %v246
        %v354 = vpop.permute.xlu0 %353
        %357 = vset.pattern.permute.xlu0 0
        %358 = vperm.xlu0 %357, %v247
        %v359 = vpop.permute.xlu0 %358
        %362 = vset.pattern.permute.xlu0 0
        %363 = vperm.xlu0 %362, %v248
        %v364 = vpop.permute.xlu0 %363
        %367 = vset.pattern.permute.xlu0 0
        %368 = vperm.xlu0 %367, %v249
        %v369 = vpop.permute.xlu0 %368
        %v372 = vlaneseq
        %v373 = vshrl.u32 %v372, 7
        %v374 = vsub.s32 0, %v373
        %v375 = vrot.slane %v250, %v374
        %v376 = vlaneseq
        %v377 = vshrl.u32 %v376, 7
        %v378 = vsub.s32 1, %v377
        %v379 = vrot.slane %v250, %v378
        %v380 = vlaneseq
        %v381 = vshrl.u32 %v380, 7
        %v382 = vsub.s32 2, %v381
        %v383 = vrot.slane %v250, %v382
        %v387 = vadd.f32 %v254, %v375
        %v388 = vadd.f32 %v254, %v379
        %v389 = vadd.f32 %v254, %v383
        %v390 = vadd.f32 %v259, %v375
        %v391 = vadd.f32 %v259, %v379
        %v392 = vadd.f32 %v259, %v383
        %v393 = vadd.f32 %v264, %v375
        %v394 = vadd.f32 %v264, %v379
        %v395 = vadd.f32 %v264, %v383
        %v396 = vadd.f32 %v269, %v375
        %v397 = vadd.f32 %v269, %v379
        %v398 = vadd.f32 %v269, %v383
        %v399 = vadd.f32 %v274, %v375
        %v400 = vadd.f32 %v274, %v379
        %v401 = vadd.f32 %v274, %v383
        %v402 = vadd.f32 %v279, %v375
        %v403 = vadd.f32 %v279, %v379
        %v404 = vadd.f32 %v279, %v383
        %v405 = vadd.f32 %v284, %v375
        %v406 = vadd.f32 %v284, %v379
        %v407 = vadd.f32 %v284, %v383
        %v408 = vadd.f32 %v289, %v375
        %v409 = vadd.f32 %v289, %v379
        %v410 = vadd.f32 %v289, %v383
        %v411 = vadd.f32 %v294, %v375
        %v412 = vadd.f32 %v294, %v379
        %v413 = vadd.f32 %v294, %v383
        %v414 = vadd.f32 %v299, %v375
        %v415 = vadd.f32 %v299, %v379
        %v416 = vadd.f32 %v299, %v383
        %v417 = vadd.f32 %v304, %v375
        %v418 = vadd.f32 %v304, %v379
        %v419 = vadd.f32 %v304, %v383
        %v420 = vadd.f32 %v309, %v375
        %v421 = vadd.f32 %v309, %v379
        %v422 = vadd.f32 %v309, %v383
        %v423 = vadd.f32 %v314, %v375
        %v424 = vadd.f32 %v314, %v379
        %v425 = vadd.f32 %v314, %v383
        %v426 = vadd.f32 %v319, %v375
        %v427 = vadd.f32 %v319, %v379
        %v428 = vadd.f32 %v319, %v383
        %v429 = vadd.f32 %v324, %v375
        %v430 = vadd.f32 %v324, %v379
        %v431 = vadd.f32 %v324, %v383
        %v432 = vadd.f32 %v329, %v375
        %v433 = vadd.f32 %v329, %v379
        %v434 = vadd.f32 %v329, %v383
        %v435 = vadd.f32 %v334, %v375
        %v436 = vadd.f32 %v334, %v379
        %v437 = vadd.f32 %v334, %v383
        %v438 = vadd.f32 %v339, %v375
        %v439 = vadd.f32 %v339, %v379
        %v440 = vadd.f32 %v339, %v383
        %v441 = vadd.f32 %v344, %v375
        %v442 = vadd.f32 %v344, %v379
        %v443 = vadd.f32 %v344, %v383
        %v444 = vadd.f32 %v349, %v375
        %v445 = vadd.f32 %v349, %v379
        %v446 = vadd.f32 %v349, %v383
        %v447 = vadd.f32 %v354, %v375
        %v448 = vadd.f32 %v354, %v379
        %v449 = vadd.f32 %v354, %v383
        %v450 = vadd.f32 %v359, %v375
        %v451 = vadd.f32 %v359, %v379
        %v452 = vadd.f32 %v359, %v383
        %v453 = vadd.f32 %v364, %v375
        %v454 = vadd.f32 %v364, %v379
        %v455 = vadd.f32 %v364, %v383
        %v456 = vadd.f32 %v369, %v375
        %v457 = vadd.f32 %v369, %v379
        %v458 = vadd.f32 %v369, %v383
        %v459 = vmul.f32 %v387, 0.2
        %v460 = vmul.f32 %v388, 0.2
        %v461 = vmul.f32 %v389, 0.2
        %v462 = vmul.f32 %v390, 0.2
        %v463 = vmul.f32 %v391, 0.2
        %v464 = vmul.f32 %v392, 0.2
        %v465 = vmul.f32 %v393, 0.2
        %v466 = vmul.f32 %v394, 0.2
        %v467 = vmul.f32 %v395, 0.2
        %v468 = vmul.f32 %v396, 0.2
        %v469 = vmul.f32 %v397, 0.2
        %v470 = vmul.f32 %v398, 0.2
        %v471 = vmul.f32 %v399, 0.2
        %v472 = vmul.f32 %v400, 0.2
        %v473 = vmul.f32 %v401, 0.2
        %v474 = vmul.f32 %v402, 0.2
        %v475 = vmul.f32 %v403, 0.2
        %v476 = vmul.f32 %v404, 0.2
        %v477 = vmul.f32 %v405, 0.2
        %v478 = vmul.f32 %v406, 0.2
        %v479 = vmul.f32 %v407, 0.2
        %v480 = vmul.f32 %v408, 0.2
        %v481 = vmul.f32 %v409, 0.2
        %v482 = vmul.f32 %v410, 0.2
        %v483 = vmul.f32 %v411, 0.2
        %v484 = vmul.f32 %v412, 0.2
        %v485 = vmul.f32 %v413, 0.2
        %v486 = vmul.f32 %v414, 0.2
        %v487 = vmul.f32 %v415, 0.2
        %v488 = vmul.f32 %v416, 0.2
        %v489 = vmul.f32 %v417, 0.2
        %v490 = vmul.f32 %v418, 0.2
        %v491 = vmul.f32 %v419, 0.2
        %v492 = vmul.f32 %v420, 0.2
        %v493 = vmul.f32 %v421, 0.2
        %v494 = vmul.f32 %v422, 0.2
        %v495 = vmul.f32 %v423, 0.2
        %v496 = vmul.f32 %v424, 0.2
        %v497 = vmul.f32 %v425, 0.2
        %v498 = vmul.f32 %v426, 0.2
        %v499 = vmul.f32 %v427, 0.2
        %v500 = vmul.f32 %v428, 0.2
        %v501 = vmul.f32 %v429, 0.2
        %v502 = vmul.f32 %v430, 0.2
        %v503 = vmul.f32 %v431, 0.2
        %v504 = vmul.f32 %v432, 0.2
        %v505 = vmul.f32 %v433, 0.2
        %v506 = vmul.f32 %v434, 0.2
        %v507 = vmul.f32 %v435, 0.2
        %v508 = vmul.f32 %v436, 0.2
        %v509 = vmul.f32 %v437, 0.2
        %v510 = vmul.f32 %v438, 0.2
        %v511 = vmul.f32 %v439, 0.2
        %v512 = vmul.f32 %v440, 0.2
        %v513 = vmul.f32 %v441, 0.2
        %v514 = vmul.f32 %v442, 0.2
        %v515 = vmul.f32 %v443, 0.2
        %v516 = vmul.f32 %v444, 0.2
        %v517 = vmul.f32 %v445, 0.2
        %v518 = vmul.f32 %v446, 0.2
        %v519 = vmul.f32 %v447, 0.2
        %v520 = vmul.f32 %v448, 0.2
        %v521 = vmul.f32 %v449, 0.2
        %v522 = vmul.f32 %v450, 0.2
        %v523 = vmul.f32 %v451, 0.2
        %v524 = vmul.f32 %v452, 0.2
        %v525 = vmul.f32 %v453, 0.2
        %v526 = vmul.f32 %v454, 0.2
        %v527 = vmul.f32 %v455, 0.2
        %v528 = vmul.f32 %v456, 0.2
        %v529 = vmul.f32 %v457, 0.2
        %v530 = vmul.f32 %v458, 0.2
        %v531 = vmax.f32 %v387, %v459
        %v532 = vmax.f32 %v388, %v460
        %v533 = vmax.f32 %v389, %v461
        %v534 = vmax.f32 %v390, %v462
        %v535 = vmax.f32 %v391, %v463
        %v536 = vmax.f32 %v392, %v464
        %v537 = vmax.f32 %v393, %v465
        %v538 = vmax.f32 %v394, %v466
        %v539 = vmax.f32 %v395, %v467
        %v540 = vmax.f32 %v396, %v468
        %v541 = vmax.f32 %v397, %v469
        %v542 = vmax.f32 %v398, %v470
        %v543 = vmax.f32 %v399, %v471
        %v544 = vmax.f32 %v400, %v472
        %v545 = vmax.f32 %v401, %v473
        %v546 = vmax.f32 %v402, %v474
        %v547 = vmax.f32 %v403, %v475
        %v548 = vmax.f32 %v404, %v476
        %v549 = vmax.f32 %v405, %v477
        %v550 = vmax.f32 %v406, %v478
        %v551 = vmax.f32 %v407, %v479
        %v552 = vmax.f32 %v408, %v480
        %v553 = vmax.f32 %v409, %v481
        %v554 = vmax.f32 %v410, %v482
        %v555 = vmax.f32 %v411, %v483
        %v556 = vmax.f32 %v412, %v484
        %v557 = vmax.f32 %v413, %v485
        %v558 = vmax.f32 %v414, %v486
        %v559 = vmax.f32 %v415, %v487
        %v560 = vmax.f32 %v416, %v488
        %v561 = vmax.f32 %v417, %v489
        %v562 = vmax.f32 %v418, %v490
        %v563 = vmax.f32 %v419, %v491
        %v564 = vmax.f32 %v420, %v492
        %v565 = vmax.f32 %v421, %v493
        %v566 = vmax.f32 %v422, %v494
        %v567 = vmax.f32 %v423, %v495
        %v568 = vmax.f32 %v424, %v496
        %v569 = vmax.f32 %v425, %v497
        %v570 = vmax.f32 %v426, %v498
        %v571 = vmax.f32 %v427, %v499
        %v572 = vmax.f32 %v428, %v500
        %v573 = vmax.f32 %v429, %v501
        %v574 = vmax.f32 %v430, %v502
        %v575 = vmax.f32 %v431, %v503
        %v576 = vmax.f32 %v432, %v504
        %v577 = vmax.f32 %v433, %v505
        %v578 = vmax.f32 %v434, %v506
        %v579 = vmax.f32 %v435, %v507
        %v580 = vmax.f32 %v436, %v508
        %v581 = vmax.f32 %v437, %v509
        %v582 = vmax.f32 %v438, %v510
        %v583 = vmax.f32 %v439, %v511
        %v584 = vmax.f32 %v440, %v512
        %v585 = vmax.f32 %v441, %v513
        %v586 = vmax.f32 %v442, %v514
        %v587 = vmax.f32 %v443, %v515
        %v588 = vmax.f32 %v444, %v516
        %v589 = vmax.f32 %v445, %v517
        %v590 = vmax.f32 %v446, %v518
        %v591 = vmax.f32 %v447, %v519
        %v592 = vmax.f32 %v448, %v520
        %v593 = vmax.f32 %v449, %v521
        %v594 = vmax.f32 %v450, %v522
        %v595 = vmax.f32 %v451, %v523
        %v596 = vmax.f32 %v452, %v524
        %v597 = vmax.f32 %v453, %v525
        %v598 = vmax.f32 %v454, %v526
        %v599 = vmax.f32 %v455, %v527
        %v600 = vmax.f32 %v456, %v528
        %v601 = vmax.f32 %v457, %v529
        %v602 = vmax.f32 %v458, %v530
        %603 = vst [vmem:[%s212] sm:$0xff] %v531
        %604 = vst [vmem:[%s212 + $0x8] sm:$0xff] %v532
        %605 = vst [vmem:[%s212 + $0x10] sm:$0xff] %v533
        %606 = vst [vmem:[%s212 + $0x18] sm:$0xff] %v534
        %607 = vst [vmem:[%s212 + $0x20] sm:$0xff] %v535
        %608 = vst [vmem:[%s212 + $0x28] sm:$0xff] %v536
        %609 = vst [vmem:[%s212 + $0x30] sm:$0xff] %v537
        %610 = vst [vmem:[%s212 + $0x38] sm:$0xff] %v538
        %611 = vst [vmem:[%s212 + $0x40] sm:$0xff] %v539
        %612 = vst [vmem:[%s212 + $0x48] sm:$0xff] %v540
        %613 = vst [vmem:[%s212 + $0x50] sm:$0xff] %v541
        %614 = vst [vmem:[%s212 + $0x58] sm:$0xff] %v542
        %615 = vst [vmem:[%s212 + $0x60] sm:$0xff] %v543
        %616 = vst [vmem:[%s212 + $0x68] sm:$0xff] %v544
        %617 = vst [vmem:[%s212 + $0x70] sm:$0xff] %v545
        %618 = vst [vmem:[%s212 + $0x78] sm:$0xff] %v546
        %619 = vst [vmem:[%s212 + $0x80] sm:$0xff] %v547
        %620 = vst [vmem:[%s212 + $0x88] sm:$0xff] %v548
        %621 = vst [vmem:[%s212 + $0x90] sm:$0xff] %v549
        %622 = vst [vmem:[%s212 + $0x98] sm:$0xff] %v550
        %623 = vst [vmem:[%s212 + $0xa0] sm:$0xff] %v551
        %624 = vst [vmem:[%s212 + $0xa8] sm:$0xff] %v552
        %625 = vst [vmem:[%s212 + $0xb0] sm:$0xff] %v553
        %626 = vst [vmem:[%s212 + $0xb8] sm:$0xff] %v554
        %627 = vst [vmem:[%s212 + $0xc0] sm:$0xff] %v555
        %628 = vst [vmem:[%s212 + $0xc8] sm:$0xff] %v556
        %629 = vst [vmem:[%s212 + $0xd0] sm:$0xff] %v557
        %630 = vst [vmem:[%s212 + $0xd8] sm:$0xff] %v558
        %631 = vst [vmem:[%s212 + $0xe0] sm:$0xff] %v559
        %632 = vst [vmem:[%s212 + $0xe8] sm:$0xff] %v560
        %633 = vst [vmem:[%s212 + $0xf0] sm:$0xff] %v561
        %634 = vst [vmem:[%s212 + $0xf8] sm:$0xff] %v562
        %635 = vst [vmem:[%s212 + $0x100] sm:$0xff] %v563
        %636 = vst [vmem:[%s212 + $0x108] sm:$0xff] %v564
        %637 = vst [vmem:[%s212 + $0x110] sm:$0xff] %v565
        %638 = vst [vmem:[%s212 + $0x118] sm:$0xff] %v566
        %639 = vst [vmem:[%s212 + $0x120] sm:$0xff] %v567
        %640 = vst [vmem:[%s212 + $0x128] sm:$0xff] %v568
        %641 = vst [vmem:[%s212 + $0x130] sm:$0xff] %v569
        %642 = vst [vmem:[%s212 + $0x138] sm:$0xff] %v570
        %643 = vst [vmem:[%s212 + $0x140] sm:$0xff] %v571
        %644 = vst [vmem:[%s212 + $0x148] sm:$0xff] %v572
        %645 = vst [vmem:[%s212 + $0x150] sm:$0xff] %v573
        %646 = vst [vmem:[%s212 + $0x158] sm:$0xff] %v574
        %647 = vst [vmem:[%s212 + $0x160] sm:$0xff] %v575
        %648 = vst [vmem:[%s212 + $0x168] sm:$0xff] %v576
        %649 = vst [vmem:[%s212 + $0x170] sm:$0xff] %v577
        %650 = vst [vmem:[%s212 + $0x178] sm:$0xff] %v578
        %651 = vst [vmem:[%s212 + $0x180] sm:$0xff] %v579
        %652 = vst [vmem:[%s212 + $0x188] sm:$0xff] %v580
        %653 = vst [vmem:[%s212 + $0x190] sm:$0xff] %v581
        %654 = vst [vmem:[%s212 + $0x198] sm:$0xff] %v582
        %655 = vst [vmem:[%s212 + $0x1a0] sm:$0xff] %v583
        %656 = vst [vmem:[%s212 + $0x1a8] sm:$0xff] %v584
        %657 = vst [vmem:[%s212 + $0x1b0] sm:$0xff] %v585
        %658 = vst [vmem:[%s212 + $0x1b8] sm:$0xff] %v586
        %659 = vst [vmem:[%s212 + $0x1c0] sm:$0xff] %v587
        %660 = vst [vmem:[%s212 + $0x1c8] sm:$0xff] %v588
        %661 = vst [vmem:[%s212 + $0x1d0] sm:$0xff] %v589
        %662 = vst [vmem:[%s212 + $0x1d8] sm:$0xff] %v590
        %663 = vst [vmem:[%s212 + $0x1e0] sm:$0xff] %v591
        %664 = vst [vmem:[%s212 + $0x1e8] sm:$0xff] %v592
        %665 = vst [vmem:[%s212 + $0x1f0] sm:$0xff] %v593
        %666 = vst [vmem:[%s212 + $0x1f8] sm:$0xff] %v594
        %667 = vst [vmem:[%s212 + $0x200] sm:$0xff] %v595
        %668 = vst [vmem:[%s212 + $0x208] sm:$0xff] %v596
        %669 = vst [vmem:[%s212 + $0x210] sm:$0xff] %v597
        %670 = vst [vmem:[%s212 + $0x218] sm:$0xff] %v598
        %671 = vst [vmem:[%s212 + $0x220] sm:$0xff] %v599
        %672 = vst [vmem:[%s212 + $0x228] sm:$0xff] %v600
        %673 = vst [vmem:[%s212 + $0x230] sm:$0xff] %v601
        %674 = vst [vmem:[%s212 + $0x238] sm:$0xff] %v602
        %s675 = sand.u32 %s106, 1
        %s676 = scalar_lea.sflag [#allocation4], %s675
        %s677 = sand.u32 %s106, 1
        %s678 = smul.addr %s677, 576
        %s679 = scalar_lea.vmem [#allocation5], %s678
        // Predicated region
        $region33: #{tpu_custom_call.1} parent=27 // pred_check
          %p680 = pneg %p116
        $region34: #{tpu_custom_call.1} parent=27 // pred_check_branch
          %682 = sbr.rel (%p680) target = $region36
        $region35: #{tpu_custom_call.1} parent=27 // pred_region
          %s683 = smul.u32 24, %s25
          %s684 = smul.u32 3, %s26
          %s686 = ssub.s32 9216, 9216
          %687 = vsyncadd %s676, %s686
          %s688 = smul.addr %s683, 3
          %s689 = sadd.s32 %s684, %s688
          %s690 = smul.addr %s24, 144
          %s691 = sadd.s32 %s689, %s690
          %s692 = smul.addr %s691, 128
          %s693 = scalar_lea.hbm %s2, %s692
          %s694 = sshll.u32 %s679, 4
          %s695 = int_to_ptr.vmem [resolvable:$true] %s694
          %700 = dma.vmem_to_hbm [thread:$0]  %s695, 9216, %s693, %s676, 384, 384, 24
        $region36: #{tpu_custom_call.1} parent=27 // pred_fallthru
          _
      $region28: #{tpu_custom_call.1} parent=5 // pred_fallthru
        _
      %p701 = scmp.le.s32.totalorder 2, %s14
      // Predicated region
      $region37: #{tpu_custom_call.1} parent=5 // pred_check
        %p702 = pneg %p701
      $region38: #{tpu_custom_call.1} parent=5 // pred_check_branch
        %704 = sbr.rel (%p702) target = $region40
      $region39: #{tpu_custom_call.1} parent=5 // pred_region
        %s705 = ssub.s32 %s14, 2
        // Predicated region
        $region41: #{tpu_custom_call.1} parent=39 // pred_check
          %p706 = pneg %p122
        $region42: #{tpu_custom_call.1} parent=39 // pred_check_branch
          %708 = sbr.rel (%p706) target = $region44
        $region43: #{tpu_custom_call.1} parent=39 // pred_region
          %s709 = sand.u32 %s107, 1
          %s710 = scalar_lea.sflag [#allocation4], %s709
          %s711 = sand.u32 %s107, 1
          %s712 = smul.addr %s711, 576
          %s713 = scalar_lea.vmem [#allocation5], %s712
          %714 = dma.done %s710, 9216
        $region44: #{tpu_custom_call.1} parent=39 // pred_fallthru
          _
      $region40: #{tpu_custom_call.1} parent=5 // pred_fallthru
        _
    $region6: #{tpu_custom_call.1} parent=1 // loop_footer
      %s18 = sadd.s32 1, %s14
    $region7: #{tpu_custom_call.1} parent=1 // loop_footer_branch
      %13 = sbr.rel target = $region3
    $region8: #{tpu_custom_call.1} parent=1 // loop_exit
      _
    %715 = vsyncpa [#allocation3], 1
    %s716 = scalar_lea.sflag [#allocation3], 1
    %717 = vsyncpa %s716, 1
    %718 = vsyncpa [#allocation4], 1
    %s719 = scalar_lea.sflag [#allocation4], 1
    %720 = vsyncpa %s719, 1

</llo_original>
